<compile_context>
chip_gen: v6e
topology: v6e:2x2x1
jax: 0.10.0
libtpu: 0.0.40
codegen_flags: <defaults>
</compile_context>

<pallas_src>
import functools

import jax
import jax.numpy as jnp
from jax.experimental import pallas as pl
from jax.experimental.pallas import tpu as pltpu


def _round_up(x, m):
    return ((x + m - 1) // m) * m


def _pick_tile_n(n, c, itemsize, vmem_budget_bytes=8 * 1024 * 1024):
    """Largest lane-tile (multiple of 128) whose double-buffered logits block
    fits a conservative VMEM budget on every TPU generation (incl. v7x)."""
    max_by_vmem = max(128, vmem_budget_bytes // (2 * c * itemsize))
    tile = min(max_by_vmem, 16 * 1024, _round_up(n, 128))
    return max(128, (tile // 128) * 128)


def _focal_loss_kernel(logits_ref, targets_ref, out_ref, acc_ref, *,
                       alpha, gamma, n_total, tile_n, tiles_per_part):
    p = pl.program_id(0)          # part index ("parallel" axis -> per-TC on v7x)
    i = pl.program_id(1)          # batch-tile index within this part

    @pl.when(i == 0)
    def _init():
        acc_ref[0] = jnp.float32(0.0)

    logits = logits_ref[...].astype(jnp.float32)          # (C, T), class on sublanes
    tgt = targets_ref[...]                                # (1, T) int32
    c, t = logits.shape

    # Numerically stable softmax pieces, reduced over the class (sublane) axis.
    m = jnp.max(logits, axis=0, keepdims=True)            # (1, T)
    e = jnp.exp(logits - m)                               # (C, T): single EUP pass
    sumexp = jnp.sum(e, axis=0, keepdims=True)            # (1, T)

    # Gather the target row via iota + select (no dynamic gather on TPU).
    row = jax.lax.broadcasted_iota(jnp.int32, (c, t), 0)
    onehot = row == tgt                                   # (C, T)
    tgt_logit = jnp.sum(jnp.where(onehot, logits, 0.0), axis=0, keepdims=True)
    tgt_exp = jnp.sum(jnp.where(onehot, e, 0.0), axis=0, keepdims=True)

    ce = (m - tgt_logit) + jnp.log(sumexp)                # per-sample cross entropy
    pt = tgt_exp / sumexp                                 # reuse exp; avoids exp(-ce)
    one_m_pt = jnp.maximum(1.0 - pt, 0.0)                 # clamp against pt > 1 rounding

    g = float(gamma)
    if g == 2.0:                                          # fast path for the module default
        w = one_m_pt * one_m_pt
    elif g.is_integer() and 0.0 <= g <= 8.0:              # small integer gamma: VPU multiplies
        w = jnp.ones_like(one_m_pt)
        for _ in range(int(g)):
            w = w * one_m_pt
    else:                                                 # general gamma (clamped base, no NaN)
        w = jnp.power(one_m_pt, g)
    focal = alpha * w * ce                                # (1, T)

    # Mask lanes past the true batch size: handles the last partial tile and the
    # fully-out-of-range tiles of the last part (whose data block was clamped).
    tile_idx = p * tiles_per_part + i
    col = jax.lax.broadcasted_iota(jnp.int32, (1, t), 1)
    valid = tile_idx * tile_n + col < n_total
    acc_ref[0] += jnp.sum(jnp.where(valid, focal, 0.0))

    # Write this part's partial sum once, as a full lane-dense (8, 128) tile
    # (partial sum at [0, 0], zeros elsewhere) so the wrapper can jnp.sum() it.
    @pl.when(i == pl.num_programs(1) - 1)
    def _finalize():
        r = jax.lax.broadcasted_iota(jnp.int32, out_ref.shape, 0)
        cc = jax.lax.broadcasted_iota(jnp.int32, out_ref.shape, 1)
        out_ref[...] = jnp.where((r == 0) & (cc == 0), acc_ref[0], 0.0)


def focal_loss(inputs, targets, alpha=0.5, gamma=2.0, *, tile_n=None, num_parts=2):
    """inputs: (N, C) float logits (f32 or bf16); targets: (N,) int class ids."""
    n, c = inputs.shape
    logits_t = inputs.T                                   # (C, N): batch on the lane axis
    targets_2d = targets.astype(jnp.int32).reshape(1, n)

    if tile_n is None:
        tile_n = _pick_tile_n(n, c, jnp.dtype(inputs.dtype).itemsize)
    n_tiles = pl.cdiv(n, tile_n)
    tiles_per_part = pl.cdiv(n_tiles, num_parts)

    def data_index(p, i):
        # Clamp so overshoot steps of the last part re-read a valid block; their
        # lanes are fully masked in the kernel and contribute zero.
        return (0, jnp.minimum(p * tiles_per_part + i, n_tiles - 1))

    kernel = functools.partial(
        _focal_loss_kernel, alpha=float(alpha), gamma=float(gamma),
        n_total=n, tile_n=tile_n, tiles_per_part=tiles_per_part)

    partials = pl.pallas_call(
        kernel,
        out_shape=jax.ShapeDtypeStruct((num_parts * 8, 128), jnp.float32),
        grid_spec=pltpu.PrefetchScalarGridSpec(
            num_scalar_prefetch=0,
            grid=(num_parts, tiles_per_part),
            in_specs=[
                pl.BlockSpec((c, tile_n), data_index),    # logits tile (C, TILE_N)
                pl.BlockSpec((1, tile_n), data_index),    # targets tile (1, TILE_N)
            ],
            out_specs=pl.BlockSpec((8, 128), lambda p, i: (p, 0)),
            scratch_shapes=[pltpu.SMEM((1,), jnp.float32)],
        ),
        compiler_params=pltpu.CompilerParams(
            dimension_semantics=("parallel", "arbitrary"),
            vmem_limit_bytes=32 * 1024 * 1024,
        ),
    )(logits_t, targets_2d)

    return jnp.sum(partials) / jnp.float32(n)


def _focal_loss_ref(inputs, targets, alpha=0.5, gamma=2.0):
    # Pure-JAX reference mirroring the PyTorch module.
    logits = inputs.astype(jnp.float32)
    lse = jax.nn.logsumexp(logits, axis=-1)
    tgt_logit = jnp.take_along_axis(
        logits, targets.astype(jnp.int32)[:, None], axis=-1)[:, 0]
    ce = lse - tgt_logit
    pt = jnp.exp(-ce)
    return jnp.mean(alpha * (1.0 - pt) ** gamma * ce)


if __name__ == "__main__":
    key = jax.random.PRNGKey(0)
    k1, k2, k3, k4 = jax.random.split(key, 4)

    # Case 1: small ASVspoof-style classifier batch (matches the module spec).
    N, C = 8, 4
    inputs = jax.random.normal(k1, (N, C), dtype=jnp.float32)
    targets = jax.random.randint(k2, (N,), 0, C, dtype=jnp.int32)
    loss = focal_loss(inputs, targets, alpha=0.5, gamma=2.0)
    jax.block_until_ready(loss)
    ref = _focal_loss_ref(inputs, targets, alpha=0.5, gamma=2.0)
    assert jnp.allclose(loss, ref, rtol=1e-4, atol=1e-6), (loss, ref)

    # Case 2: exercises multi-tile accumulation, partial-tile masking, and the
    # clamped overshoot tiles of the second part (N=600, TILE_N=128 -> 5 tiles).
    N2, C2 = 600, 4
    inputs2 = jax.random.normal(k3, (N2, C2), dtype=jnp.float32)
    targets2 = jax.random.randint(k4, (N2,), 0, C2, dtype=jnp.int32)
    loss2 = focal_loss(inputs2, targets2, alpha=0.5, gamma=2.0, tile_n=128)
    jax.block_until_ready(loss2)
    ref2 = _focal_loss_ref(inputs2, targets2, alpha=0.5, gamma=2.0)
    assert jnp.allclose(loss2, ref2, rtol=1e-4, atol=1e-6), (loss2, ref2)

    print("KERNEL_OK")
</pallas_src>

<mosaic_0001>
module attributes {stable_mosaic.version = 11 : i64} {
  func.func @_focal_loss_kernel(%arg0: i32, %arg1: i32, %arg2: memref<4x128xf32, #tpu.memory_space<vmem>>, %arg3: memref<1x128xi32, #tpu.memory_space<vmem>>, %arg4: memref<8x128xf32, #tpu.memory_space<vmem>>, %arg5: memref<1xf32, #tpu.memory_space<smem>>) attributes {dimension_semantics = [#tpu.dimension_semantics<parallel>, #tpu.dimension_semantics<arbitrary>], iteration_bounds = array<i64: 2, 1>, scalar_prefetch = 0 : i64, scratch_operands = 1 : i64, tpu.core_type = #tpu.core_type<tc>, window_params = [{transform_indices = @transform_0, window_bounds = array<i64: 4, 128>}, {transform_indices = @transform_1, window_bounds = array<i64: 1, 128>}, {transform_indices = @transform_2, window_bounds = array<i64: 8, 128>}]} {
    %c0_i32 = arith.constant 0 : i32
    %0 = arith.cmpi eq, %arg1, %c0_i32 : i32
    %1 = arith.extui %0 : i1 to i32
    %c0_i32_0 = arith.constant 0 : i32
    %2 = arith.cmpi ne, %1, %c0_i32_0 : i32
    scf.if %2 {
      %cst_18 = arith.constant 0.000000e+00 : f32
      %c0_19 = arith.constant 0 : index
      %55 = memref.load %arg5[%c0_19] : memref<1xf32, #tpu.memory_space<smem>>
      memref.store %cst_18, %arg5[%c0_19] : memref<1xf32, #tpu.memory_space<smem>>
    } else {
    }
    %c0 = arith.constant 0 : index
    %c0_1 = arith.constant 0 : index
    %3 = vector.load %arg2[%c0, %c0_1] : memref<4x128xf32, #tpu.memory_space<vmem>>, vector<4x128xf32>
    %c0_2 = arith.constant 0 : index
    %c0_3 = arith.constant 0 : index
    %4 = vector.load %arg3[%c0_2, %c0_3] : memref<1x128xi32, #tpu.memory_space<vmem>>, vector<1x128xi32>
    %cst = arith.constant dense<0xFF800000> : vector<128xf32>
    %5 = vector.multi_reduction <maximumf>, %3, %cst [0] : vector<4x128xf32> to vector<128xf32>
    %6 = vector.shape_cast %5 : vector<128xf32> to vector<1x128xf32>
    %7 = vector.broadcast %6 : vector<1x128xf32> to vector<4x128xf32>
    %8 = arith.subf %3, %7 : vector<4x128xf32>
    %9 = math.exp %8 : vector<4x128xf32>
    %cst_4 = arith.constant dense<0.000000e+00> : vector<128xf32>
    %10 = vector.multi_reduction <add>, %9, %cst_4 [0] : vector<4x128xf32> to vector<128xf32>
    %11 = vector.shape_cast %10 : vector<128xf32> to vector<1x128xf32>
    %12 = tpu.iota {dimensions = array<i32: 0>} : vector<4x128xi32>
    %13 = vector.broadcast %4 : vector<1x128xi32> to vector<4x128xi32>
    %14 = arith.cmpi eq, %12, %13 : vector<4x128xi32>
    %cst_5 = arith.constant 0.000000e+00 : f32
    %15 = vector.broadcast %cst_5 : f32 to vector<4x128xf32>
    %16 = arith.select %14, %3, %15 : vector<4x128xi1>, vector<4x128xf32>
    %cst_6 = arith.constant dense<0.000000e+00> : vector<128xf32>
    %17 = vector.multi_reduction <add>, %16, %cst_6 [0] : vector<4x128xf32> to vector<128xf32>
    %18 = vector.shape_cast %17 : vector<128xf32> to vector<1x128xf32>
    %cst_7 = arith.constant 0.000000e+00 : f32
    %19 = vector.broadcast %cst_7 : f32 to vector<4x128xf32>
    %20 = arith.select %14, %9, %19 : vector<4x128xi1>, vector<4x128xf32>
    %cst_8 = arith.constant dense<0.000000e+00> : vector<128xf32>
    %21 = vector.multi_reduction <add>, %20, %cst_8 [0] : vector<4x128xf32> to vector<128xf32>
    %22 = vector.shape_cast %21 : vector<128xf32> to vector<1x128xf32>
    %23 = arith.subf %6, %18 : vector<1x128xf32>
    %24 = math.log %11 : vector<1x128xf32>
    %25 = arith.addf %23, %24 : vector<1x128xf32>
    %26 = arith.divf %22, %11 : vector<1x128xf32>
    %cst_9 = arith.constant 1.000000e+00 : f32
    %27 = vector.broadcast %cst_9 : f32 to vector<1x128xf32>
    %28 = arith.subf %27, %26 : vector<1x128xf32>
    %cst_10 = arith.constant 0.000000e+00 : f32
    %29 = vector.broadcast %cst_10 : f32 to vector<1x128xf32>
    %30 = arith.maximumf %28, %29 : vector<1x128xf32>
    %31 = arith.mulf %30, %30 : vector<1x128xf32>
    %cst_11 = arith.constant 5.000000e-01 : f32
    %32 = vector.broadcast %cst_11 : f32 to vector<1x128xf32>
    %33 = arith.mulf %32, %31 : vector<1x128xf32>
    %34 = arith.mulf %33, %25 : vector<1x128xf32>
    %c1_i32 = arith.constant 1 : i32
    %35 = arith.muli %arg0, %c1_i32 : i32
    %36 = arith.addi %35, %arg1 : i32
    %37 = tpu.iota {dimensions = array<i32: 1>} : vector<1x128xi32>
    %c128_i32 = arith.constant 128 : i32
    %38 = arith.muli %36, %c128_i32 : i32
    %39 = vector.broadcast %38 : i32 to vector<1x128xi32>
    %40 = arith.addi %39, %37 : vector<1x128xi32>
    %c8_i32 = arith.constant 8 : i32
    %41 = vector.broadcast %c8_i32 : i32 to vector<1x128xi32>
    %42 = arith.cmpi slt, %40, %41 : vector<1x128xi32>
    %c0_12 = arith.constant 0 : index
    %43 = memref.load %arg5[%c0_12] : memref<1xf32, #tpu.memory_space<smem>>
    %cst_13 = arith.constant 0.000000e+00 : f32
    %44 = vector.broadcast %cst_13 : f32 to vector<1x128xf32>
    %45 = arith.select %42, %34, %44 : vector<1x128xi1>, vector<1x128xf32>
    %46 = vector.shape_cast %45 : vector<1x128xf32> to vector<1x1x128xf32>
    %cst_14 = arith.constant dense<0.000000e+00> : vector<1xf32>
    %47 = vector.multi_reduction <add>, %46, %cst_14 [1, 2] : vector<1x1x128xf32> to vector<1xf32>
    %48 = vector.shape_cast %47 : vector<1xf32> to vector<1x1x1xf32>
    %49 = vector.extract %48[0, 0, 0] : f32 from vector<1x1x1xf32>
    %50 = arith.addf %43, %49 : f32
    %c0_15 = arith.constant 0 : index
    %51 = memref.load %arg5[%c0_15] : memref<1xf32, #tpu.memory_space<smem>>
    memref.store %50, %arg5[%c0_15] : memref<1xf32, #tpu.memory_space<smem>>
    %c0_i32_16 = arith.constant 0 : i32
    %52 = arith.cmpi eq, %arg1, %c0_i32_16 : i32
    %53 = arith.extui %52 : i1 to i32
    %c0_i32_17 = arith.constant 0 : i32
    %54 = arith.cmpi ne, %53, %c0_i32_17 : i32
    scf.if %54 {
      %55 = tpu.iota {dimensions = array<i32: 0>} : vector<8x128xi32>
      %56 = tpu.iota {dimensions = array<i32: 1>} : vector<8x128xi32>
      %c0_i32_18 = arith.constant 0 : i32
      %57 = vector.broadcast %c0_i32_18 : i32 to vector<8x128xi32>
      %58 = arith.cmpi eq, %55, %57 : vector<8x128xi32>
      %c0_i32_19 = arith.constant 0 : i32
      %59 = vector.broadcast %c0_i32_19 : i32 to vector<8x128xi32>
      %60 = arith.cmpi eq, %56, %59 : vector<8x128xi32>
      %61 = arith.andi %58, %60 : vector<8x128xi1>
      %c0_20 = arith.constant 0 : index
      %62 = memref.load %arg5[%c0_20] : memref<1xf32, #tpu.memory_space<smem>>
      %cst_21 = arith.constant 0.000000e+00 : f32
      %63 = vector.broadcast %62 : f32 to vector<8x128xf32>
      %64 = vector.broadcast %cst_21 : f32 to vector<8x128xf32>
      %65 = arith.select %61, %63, %64 : vector<8x128xi1>, vector<8x128xf32>
      %c0_22 = arith.constant 0 : index
      %c0_23 = arith.constant 0 : index
      %66 = vector.load %arg4[%c0_22, %c0_23] : memref<8x128xf32, #tpu.memory_space<vmem>>, vector<8x128xf32>
      tpu.vector_store %arg4[%c0_22, %c0_23], %65 {strides = array<i32>} : memref<8x128xf32, #tpu.memory_space<vmem>>, vector<8x128xf32>,
    } else {
    }
    return
  }
  func.func @transform_0(%arg0: i32, %arg1: i32) -> (i32, i32) {
    %c1_i32 = arith.constant 1 : i32
    %0 = arith.muli %arg0, %c1_i32 : i32
    %1 = arith.addi %0, %arg1 : i32
    %c0_i32 = arith.constant 0 : i32
    %2 = arith.minsi %1, %c0_i32 : i32
    %c0_i32_0 = arith.constant 0 : i32
    %c0_i32_1 = arith.constant 0 : i32
    return %c0_i32_0, %2 : i32, i32
  }
  func.func @transform_1(%arg0: i32, %arg1: i32) -> (i32, i32) {
    %c1_i32 = arith.constant 1 : i32
    %0 = arith.muli %arg0, %c1_i32 : i32
    %1 = arith.addi %0, %arg1 : i32
    %c0_i32 = arith.constant 0 : i32
    %2 = arith.minsi %1, %c0_i32 : i32
    %c0_i32_0 = arith.constant 0 : i32
    %c0_i32_1 = arith.constant 0 : i32
    return %c0_i32_0, %2 : i32, i32
  }
  func.func @transform_2(%arg0: i32, %arg1: i32) -> (i32, i32) {
    %c0_i32 = arith.constant 0 : i32
    %c0_i32_0 = arith.constant 0 : i32
    return %arg0, %c0_i32 : i32, i32
  }
}

</mosaic_0001>

<llo_original>
// kernel: tpu_custom_call.1
$region0: #{tpu_custom_call.1}
  #allocation0 [shape = 'u32[]', space=smem, size = 0x4, offset = 0x4, fixed_abs, tag = 'smem constant byte address 0x4 - core index']
  #allocation1 [shape = 'u32[144,128]{1,0:T(1,128)}', space=vmem, size = 0x12000, scoped, tag = 'internal scratch']
  #allocation2 [shape = 'f32[1]{0:T(128)}', space=smem, size = 0x200, scoped, tag = 'scratch operand']
  %s0 = inlined_call_operand.hbm [shape: f32[4,8], index: 0, kind: input, shape index: {}]
  %s1 = inlined_call_operand.vmem [shape: s32[1,8], index: 1, kind: input, shape index: {}]
  %s2 = inlined_call_operand.hbm [shape: f32[16,128], index: 2, kind: output, shape index: {}]
  %s3 = sld [smem:[#allocation0]]
  $region53: #{tpu_custom_call.1} parent=0
    _
  %s5 = ssub.s32 1, %s3
  %s6 = scalar_select 0, %s5, %s3
  $region1: #{tpu_custom_call.1} parent=0
    #allocation3 [shape = 'u8[4096]{0}', space=vmem, size = 0x1000, scoped, tag = 'input window, operand 0']
    #allocation4 [shape = 's32[2]{0}', space=sflag, size = 0x8, scoped, tag = 'scoped memory for tpu_custom_call.1']
    #allocation5 [shape = 's32[2]{0}', space=sflag, size = 0x8, scoped, tag = 'scoped memory for tpu_custom_call.1']
    #allocation6 [shape = 'u8[8192]{0}', space=vmem, size = 0x2000, scoped, tag = 'output window, operand 0']
    %7 = vsyncpa [#allocation4], 0
    %s8 = scalar_lea.sflag [#allocation4], 1
    %9 = vsyncpa %s8, 0
    %10 = vsyncpa [#allocation5], 0
    %s11 = scalar_lea.sflag [#allocation5], 1
    %12 = vsyncpa %s11, 0
    loop: start=0, step=1, limit=4
    $region2: #{tpu_custom_call.1} parent=1 // loop_pre_header
      _
    $region3: #{tpu_custom_call.1} parent=1 // loop_header
      %s14 = sphi 0, %s18
      %p15 = scmp.ge.s32.totalorder %s14, 4
      %s21 = sphi 0, %s33
      %s22 = sphi 0, %s29
      %s23 = sphi 0, %s21
      %s24 = sphi 0, %s22
      %s25 = sphi 0, %s23
      %s26 = sphi 0, %s24
      %s42 = sphi 0, %s44
      %s45 = sphi 0, %s42
      %s46 = sphi 0, %s45
      %s62 = sphi 0, %s46
      %s74 = sphi 0, %s76
      %s77 = sphi 0, %s74
      %s78 = sphi 0, %s77
      %s94 = sphi 0, %s78
      %s100 = sphi 0, %s102
      %s103 = sphi 0, %s100
      %s104 = sphi 0, %s103
      %s120 = sphi 0, %s104
    $region4: #{tpu_custom_call.1} parent=1 // loop_header_branch
      %17 = sbr.rel (%p15) target = $region8
    $region5: #{tpu_custom_call.1} parent=1 // loop_body
      %s19 = ssub.s32 %s14, 1
      %s20 = ssub.s32 %s14, 2
      %s27 = sadd.s32 1, %s22
      %p28 = scmp.ge.s32.totalorder %s27, 1
      %s29 = scalar_select %p28, 0, %s27
      %s30 = sadd.s32 1, %s21
      %s31 = scalar_select %p28, %s30, %s21
      %p32 = scmp.ge.s32.totalorder %s31, 2
      %s33 = scalar_select %p32, 0, %s31
      %s34 = sadd.s32 %s21, %s22
      %p35 = scmp.lt.s32.totalorder %s34, 0
      %s36 = scalar_select %p35, %s34, 0
      %s37 = sadd.s32 %s33, %s29
      %p38 = scmp.lt.s32.totalorder %s37, 0
      %s39 = scalar_select %p38, %s37, 0
      %s40 = ssub.s32 %s36, %s39
      %p41 = scmp.eq.s32.totalorder %s40, 0
      %s43 = sadd.s32 %s42, 1
      %s44 = scalar_select %p41, %s42, %s43
      %p47 = pneg %p41
      %p48 = scmp.eq.s32.totalorder %s14, 1
      %p49 = por %p47, %p48
      %p50 = scmp.ne.s32.totalorder %s42, %s45
      %p51 = scmp.eq.s32.totalorder %s14, 0
      %p52 = por %p50, %p51
      %p53 = scmp.ne.s32.totalorder %s42, %s45
      %p54 = scmp.eq.s32.totalorder %s19, 1
      %p55 = por %p53, %p54
      %p56 = scmp.ne.s32.totalorder %s45, %s46
      %p57 = scmp.eq.s32.totalorder %s19, 0
      %p58 = por %p56, %p57
      %p59 = scmp.ne.s32.totalorder %s45, %s46
      %p60 = scmp.eq.s32.totalorder %s20, 1
      %p61 = por %p59, %p60
      %p63 = scmp.ne.s32.totalorder %s46, %s62
      %p64 = scmp.eq.s32.totalorder %s20, 0
      %p65 = por %p63, %p64
      %s66 = sadd.s32 %s21, %s22
      %p67 = scmp.lt.s32.totalorder %s66, 0
      %s68 = scalar_select %p67, %s66, 0
      %s69 = sadd.s32 %s33, %s29
      %p70 = scmp.lt.s32.totalorder %s69, 0
      %s71 = scalar_select %p70, %s69, 0
      %s72 = ssub.s32 %s68, %s71
      %p73 = scmp.eq.s32.totalorder %s72, 0
      %s75 = sadd.s32 %s74, 1
      %s76 = scalar_select %p73, %s74, %s75
      %p79 = pneg %p73
      %p80 = scmp.eq.s32.totalorder %s14, 1
      %p81 = por %p79, %p80
      %p82 = scmp.ne.s32.totalorder %s74, %s77
      %p83 = scmp.eq.s32.totalorder %s14, 0
      %p84 = por %p82, %p83
      %p85 = scmp.ne.s32.totalorder %s74, %s77
      %p86 = scmp.eq.s32.totalorder %s19, 1
      %p87 = por %p85, %p86
      %p88 = scmp.ne.s32.totalorder %s77, %s78
      %p89 = scmp.eq.s32.totalorder %s19, 0
      %p90 = por %p88, %p89
      %p91 = scmp.ne.s32.totalorder %s77, %s78
      %p92 = scmp.eq.s32.totalorder %s20, 1
      %p93 = por %p91, %p92
      %p95 = scmp.ne.s32.totalorder %s78, %s94
      %p96 = scmp.eq.s32.totalorder %s20, 0
      %p97 = por %p95, %p96
      %s98 = ssub.s32 %s21, %s33
      %p99 = scmp.eq.s32.totalorder %s98, 0
      %s101 = sadd.s32 %s100, 1
      %s102 = scalar_select %p99, %s100, %s101
      %p105 = pneg %p99
      %p106 = scmp.eq.s32.totalorder %s14, 1
      %p107 = por %p105, %p106
      %p108 = scmp.ne.s32.totalorder %s100, %s103
      %p109 = scmp.eq.s32.totalorder %s14, 0
      %p110 = por %p108, %p109
      %p111 = scmp.ne.s32.totalorder %s100, %s103
      %p112 = scmp.eq.s32.totalorder %s19, 1
      %p113 = por %p111, %p112
      %p114 = scmp.ne.s32.totalorder %s103, %s104
      %p115 = scmp.eq.s32.totalorder %s19, 0
      %p116 = por %p114, %p115
      %p117 = scmp.ne.s32.totalorder %s103, %s104
      %p118 = scmp.eq.s32.totalorder %s20, 1
      %p119 = por %p117, %p118
      %p121 = scmp.ne.s32.totalorder %s104, %s120
      %p122 = scmp.eq.s32.totalorder %s20, 0
      %p123 = por %p121, %p122
      %p124 = scmp.le.s32.totalorder 1, %s14
      %p125 = scmp.lt.s32.totalorder %s14, 3
      %p126 = pnand %p124, %p125
      %p127 = pneg %p126
      // Predicated region
      $region9: #{tpu_custom_call.1} parent=5 // pred_check
        _
      $region10: #{tpu_custom_call.1} parent=5 // pred_check_branch
        %129 = sbr.rel (%p126) target = $region12
      $region11: #{tpu_custom_call.1} parent=5 // pred_region
        %s130 = ssub.s32 %s14, 1
      $region12: #{tpu_custom_call.1} parent=5 // pred_fallthru
        _
      %p131 = scmp.lt.s32.totalorder %s14, 2
      // Predicated region
      $region13: #{tpu_custom_call.1} parent=5 // pred_check
        %p132 = pneg %p131
      $region14: #{tpu_custom_call.1} parent=5 // pred_check_branch
        %134 = sbr.rel (%p132) target = $region16
      $region15: #{tpu_custom_call.1} parent=5 // pred_region
        // Predicated region
        $region17: #{tpu_custom_call.1} parent=15 // pred_check
          %p135 = pneg %p52
        $region18: #{tpu_custom_call.1} parent=15 // pred_check_branch
          %137 = sbr.rel (%p135) target = $region20
        $region19: #{tpu_custom_call.1} parent=15 // pred_region
          %s138 = sand.u32 %s42, 1
          %s139 = scalar_lea.sflag [#allocation4], %s138
          %s140 = sand.u32 %s42, 1
          %s141 = smul.addr %s140, 4
          %s142 = scalar_lea.vmem [#allocation3], %s141
          %s143 = sadd.s32 %s21, %s22
          %p144 = scmp.lt.s32.totalorder %s143, 0
          %s145 = scalar_select %p144, %s143, 0
          %s147 = ssub.s32 64, 64
          %148 = vsyncadd %s139, %s147
          %s149 = smul.addr %s145, 64
          %s150 = scalar_lea.hbm %s0, %s149
          %s152 = sshll.u32 %s142, 4
          %s153 = int_to_ptr.vmem [resolvable:$true] %s152
          %155 = dma.hbm_to_vmem [thread:$0]  %s150, 64, %s153, %s139
        $region20: #{tpu_custom_call.1} parent=15 // pred_fallthru
          _
        // Predicated region
        $region21: #{tpu_custom_call.1} parent=15 // pred_check
          %p156 = pneg %p84
        $region22: #{tpu_custom_call.1} parent=15 // pred_check_branch
          %158 = sbr.rel (%p156) target = $region24
        $region23: #{tpu_custom_call.1} parent=15 // pred_region
          %s159 = sadd.s32 %s21, %s22
          %p160 = scmp.lt.s32.totalorder %s159, 0
          %s161 = scalar_select %p160, %s159, 0
          %p162 = scmp.lt.s32.totalorder %s161, 0
          %s163 = scalar_select %p162, %s161, 0
          %s164 = scalar_lea.vmem %s1, %s163
          %s165 = sadd.s32 %s21, %s22
          %p166 = scmp.lt.s32.totalorder %s165, 0
          %s167 = scalar_select %p166, %s165, 0
        $region24: #{tpu_custom_call.1} parent=15 // pred_fallthru
          _
      $region16: #{tpu_custom_call.1} parent=5 // pred_fallthru
        _
      %p168 = scmp.le.s32.totalorder 1, %s14
      %p169 = scmp.lt.s32.totalorder %s14, 3
      %p170 = pnand %p168, %p169
      %p171 = pneg %p170
      // Predicated region
      $region25: #{tpu_custom_call.1} parent=5 // pred_check
        _
      $region26: #{tpu_custom_call.1} parent=5 // pred_check_branch
        %173 = sbr.rel (%p170) target = $region28
      $region27: #{tpu_custom_call.1} parent=5 // pred_region
        %s174 = ssub.s32 %s14, 1
        %s175 = sand.u32 %s45, 1
        %s176 = scalar_lea.sflag [#allocation4], %s175
        %s177 = sand.u32 %s45, 1
        %s178 = smul.addr %s177, 4
        %s179 = scalar_lea.vmem [#allocation3], %s178
        // Predicated region
        $region29: #{tpu_custom_call.1} parent=27 // pred_check
          %p180 = pneg %p58
        $region30: #{tpu_custom_call.1} parent=27 // pred_check_branch
          %182 = sbr.rel (%p180) target = $region32
        $region31: #{tpu_custom_call.1} parent=27 // pred_region
          %183 = dma.done %s176, 64
        $region32: #{tpu_custom_call.1} parent=27 // pred_fallthru
          _
        %s184 = sand.u32 %s45, 1
        %s185 = scalar_lea.sflag [#allocation4], %s184
        %s186 = sand.u32 %s45, 1
        %s187 = smul.addr %s186, 4
        %s188 = scalar_lea.vmem [#allocation3], %s187
        %p189 = pneg %p58
        %p190 = pneg %p55
        %s191 = sadd.s32 %s23, %s24
        %p192 = scmp.lt.s32.totalorder %s191, 0
        %s193 = scalar_select %p192, %s191, 0
        %p194 = scmp.lt.s32.totalorder %s193, 0
        %s195 = scalar_select %p194, %s193, 0
        %s196 = scalar_lea.vmem %s1, %s195
        %p197 = pneg %p90
        %p198 = pneg %p87
        %p199 = pneg %p116
        %p200 = pneg %p113
        %s201 = sand.u32 %s103, 1
        %s202 = scalar_lea.sflag [#allocation5], %s201
        %s203 = sand.u32 %s103, 1
        %s204 = smul.addr %s203, 8
        %s205 = scalar_lea.vmem [#allocation6], %s204
        %s206 = sadd.s32 %s23, %s24
        %p207 = scmp.lt.s32.totalorder %s206, 0
        %s208 = scalar_select %p207, %s206, 0
        %s209 = sadd.s32 %s23, %s24
        %p210 = scmp.lt.s32.totalorder %s209, 0
        %s211 = scalar_select %p210, %s209, 0
        %p212 = scmp.lt.s32.totalorder %s211, 0
        %s213 = scalar_select %p212, %s211, 0
        %s214 = scalar_lea.vmem %s1, %s213
        %s215 = sadd.s32 %s23, %s24
        %p216 = scmp.lt.s32.totalorder %s215, 0
        %s217 = scalar_select %p216, %s215, 0
        %p218 = scmp.eq.s32.totalorder %s24, 0
        // Predicated region
        $region33: #{tpu_custom_call.1} parent=27 // pred_check
          %p219 = pneg %p218
        $region34: #{tpu_custom_call.1} parent=27 // pred_check_branch
          %221 = sbr.rel (%p219) target = $region36
        $region35: #{tpu_custom_call.1} parent=27 // pred_region
          %s222 = scalar_lea.smem [#allocation2], 0
          %223 = sst [smem:[%s222]] 0.0
        $region36: #{tpu_custom_call.1} parent=27 // pred_fallthru
          _
        %v224 = vld [vmem:[%s179] sm:$0xf]
        %v225 = vld [vmem:[%s214] sm:$0x1]
        %vm226 = vcmask 1043456
        %v227 = vsel %vm226, %v224, -inf
        %v228 = vrot.slane %v227, 4
        %v229 = vmax.f32 %v227, %v228
        %v230 = vrot.slane %v229, 2
        %v231 = vmax.f32 %v229, %v230
        %v232 = vrot.slane %v231, 1
        %v233 = vmax.f32 %v231, %v232
        %v234 = vsub.f32 %v224, %v233
        %v235 = vmul.f32 %v234, 1.442695
        %v236 = vpow.pop %v235
        %v237 = vsel %vm226, %v236, 0.0
        %v238 = vrot.slane %v237, 4
        %v239 = vadd.f32 %v237, %v238
        %v240 = vrot.slane %v239, 2
        %v241 = vadd.f32 %v239, %v240
        %v242 = vrot.slane %v241, 1
        %v243 = vadd.f32 %v241, %v242
        %v244 = vlaneseq
        %v245 = vshrl.u32 %v244, 7
        %v246 = vlaneseq
        %v247 = vshrl.u32 %v246, 7
        %v248 = vsub.s32 0, %v247
        %v249 = vrot.slane %v225, %v248
        %vm250 = vcmp.eq.s32.totalorder %v245, %v249
        %v251 = vsel %vm250, %v224, 0.0
        %v252 = vsel %vm226, %v251, 0.0
        %v253 = vrot.slane %v252, 4
        %v254 = vadd.f32 %v252, %v253
        %v255 = vrot.slane %v254, 2
        %v256 = vadd.f32 %v254, %v255
        %v257 = vrot.slane %v256, 1
        %v258 = vadd.f32 %v256, %v257
        %v259 = vsel %vm250, %v236, 0.0
        %v260 = vsel %vm226, %v259, 0.0
        %v261 = vrot.slane %v260, 4
        %v262 = vadd.f32 %v260, %v261
        %v263 = vrot.slane %v262, 2
        %v264 = vadd.f32 %v262, %v263
        %v265 = vrot.slane %v264, 1
        %v266 = vadd.f32 %v264, %v265
        %v267 = vsub.f32 %v233, %v258
        %v268 = vlog2.pop %v243
        %v269 = vmul.f32 %v268, 0.6931472
        %v270 = vadd.f32 %v267, %v269
        %v271 = vrcp.pop %v243
        %v272 = vmul.f32 %v266, %v271
        %v273 = vsub.f32 1.0, %v272
        %v274 = vmax.f32 %v273, 0.0
        %v275 = vmul.f32 %v274, %v274
        %v276 = vmul.f32 %v275, 0.5
        %v277 = vmul.f32 %v276, %v270
        %s278 = sadd.s32 %s23, %s24
        %v279 = vlaneseq
        %v280 = vand.u32 %v279, 127
        %s281 = smul.u32 %s278, 128
        %v282 = vstv %s281
        %v283 = vadd.s32 %v282, %v280
        %vm284 = vcmp.lt.s32.totalorder %v283, 8
        %s285 = sld [smem:[#allocation2]]
        %v286 = vsel %vm284, %v277, 0.0
        %vm287 = vcmask 1040384
        %v288 = vsel %vm287, %v286, 0.0
        %289 = vadd.xlane.f32.xlu0 %v288
        %v290 = vpop.xlane.xlu0 %289
        %v291 = vrot.slane %v290, 4
        %v292 = vadd.f32 %v290, %v291
        %v293 = vrot.slane %v292, 2
        %v294 = vadd.f32 %v292, %v293
        %v295 = vrot.slane %v294, 1
        %v296 = vadd.f32 %v294, %v295
        %s297 = vtos %v296
        %s298 = sadd.f32 %s285, %s297
        %s299 = scalar_lea.smem [#allocation2], 0
        %300 = sst [smem:[%s299]] %s298
        // Predicated region
        $region37: #{tpu_custom_call.1} parent=27 // pred_check
          %p301 = pneg %p218
        $region38: #{tpu_custom_call.1} parent=27 // pred_check_branch
          %303 = sbr.rel (%p301) target = $region40
        $region39: #{tpu_custom_call.1} parent=27 // pred_region
          %vm304 = vcmp.eq.s32.totalorder %v245, 0
          %vm305 = vcmp.eq.s32.totalorder %v280, 0
          %vm306 = vmand %vm304, %vm305
          %s307 = sld [smem:[#allocation2]]
          %v308 = vstv %s307
          %v309 = vsel %vm306, %v308, 0.0
          %310 = vst [vmem:[%s205] sm:$0xff] %v309
        $region40: #{tpu_custom_call.1} parent=27 // pred_fallthru
          _
        %s311 = sand.u32 %s103, 1
        %s312 = scalar_lea.sflag [#allocation5], %s311
        %s313 = sand.u32 %s103, 1
        %s314 = smul.addr %s313, 8
        %s315 = scalar_lea.vmem [#allocation6], %s314
        // Predicated region
        $region41: #{tpu_custom_call.1} parent=27 // pred_check
          %p316 = pneg %p113
        $region42: #{tpu_custom_call.1} parent=27 // pred_check_branch
          %318 = sbr.rel (%p316) target = $region44
        $region43: #{tpu_custom_call.1} parent=27 // pred_region
          %s320 = ssub.s32 128, 128
          %321 = vsyncadd %s312, %s320
          %s322 = smul.addr %s23, 128
          %s323 = scalar_lea.hbm %s2, %s322
          %s325 = sshll.u32 %s315, 4
          %s326 = int_to_ptr.vmem [resolvable:$true] %s325
          %328 = dma.vmem_to_hbm [thread:$0]  %s326, 128, %s323, %s312
        $region44: #{tpu_custom_call.1} parent=27 // pred_fallthru
          _
      $region28: #{tpu_custom_call.1} parent=5 // pred_fallthru
        _
      %p329 = scmp.le.s32.totalorder 2, %s14
      // Predicated region
      $region45: #{tpu_custom_call.1} parent=5 // pred_check
        %p330 = pneg %p329
      $region46: #{tpu_custom_call.1} parent=5 // pred_check_branch
        %332 = sbr.rel (%p330) target = $region48
      $region47: #{tpu_custom_call.1} parent=5 // pred_region
        %s333 = ssub.s32 %s14, 2
        // Predicated region
        $region49: #{tpu_custom_call.1} parent=47 // pred_check
          %p334 = pneg %p119
        $region50: #{tpu_custom_call.1} parent=47 // pred_check_branch
          %336 = sbr.rel (%p334) target = $region52
        $region51: #{tpu_custom_call.1} parent=47 // pred_region
          %s337 = sand.u32 %s104, 1
          %s338 = scalar_lea.sflag [#allocation5], %s337
          %s339 = sand.u32 %s104, 1
          %s340 = smul.addr %s339, 8
          %s341 = scalar_lea.vmem [#allocation6], %s340
          %342 = dma.done %s338, 128
        $region52: #{tpu_custom_call.1} parent=47 // pred_fallthru
          _
      $region48: #{tpu_custom_call.1} parent=5 // pred_fallthru
        _
    $region6: #{tpu_custom_call.1} parent=1 // loop_footer
      %s18 = sadd.s32 1, %s14
    $region7: #{tpu_custom_call.1} parent=1 // loop_footer_branch
      %13 = sbr.rel target = $region3
    $region8: #{tpu_custom_call.1} parent=1 // loop_exit
      _
    %343 = vsyncpa [#allocation4], 1
    %s344 = scalar_lea.sflag [#allocation4], 1
    %345 = vsyncpa %s344, 1
    %346 = vsyncpa [#allocation5], 1
    %s347 = scalar_lea.sflag [#allocation5], 1
    %348 = vsyncpa %s347, 1

</llo_original>
